<compile_context>
chip_gen: v7x
topology: tpu7x:2x2x1
jax: 0.10.0
libtpu: 0.0.40
codegen_flags: <defaults>
</compile_context>

<pallas_src>
import functools
import math
import time

import jax
import jax.numpy as jnp
from jax.experimental import pallas as pl
from jax.experimental.pallas import tpu as pltpu


TILE_B_MAX = 512                       # rows per grid step (upper bound)
_MiB = 1024 * 1024
_VMEM_SOFT_BUDGET = 40 * _MiB          # portable: v7x has 64 MiB VMEM per TC


def _round_up(x, m):
    return ((x + m - 1) // m) * m


# ----------------------------------------------------------------------------
# Fused Pallas kernel: the whole subdomain layer (all Linear [+ReLU] stages)
# ----------------------------------------------------------------------------
def _fused_layer_kernel(*refs, relus, matmul_dtype):
    """refs = (x_ref, w_0, b_0, w_1, b_1, ..., w_{S-1}, b_{S-1}, o_ref).

    x_ref: [TILE_B, D0]   w_s: [Din_s, Dout_s] (matmul_dtype)   b_s: [1, Dout_s] (f32)
    o_ref: [TILE_B, Dlast]
    The activation is chained on-chip across stages (no HBM round-trip).
    """
    x_ref = refs[0]
    o_ref = refs[-1]
    wb = refs[1:-1]

    act = x_ref[...]                              # f32 tile straight from HBM
    for s, relu in enumerate(relus):
        w = wb[2 * s][...]                        # already stored in matmul_dtype
        b = wb[2 * s + 1][...]                    # f32 [1, Dout], broadcast over batch
        y = jnp.dot(act.astype(matmul_dtype), w,  # MXU, f32 accumulation
                    preferred_element_type=jnp.float32)
        act = y + b                               # f32 elementwise epilogue
        if relu:
            act = jnp.maximum(act, 0.0)
    o_ref[...] = act.astype(o_ref.dtype)


def fused_layer(x, params, relus, tile_b, *, matmul_dtype, vmem_limit_bytes):
    """Run the whole subdomain layer as ONE pallas_call.

    x:      [B, D0]      (B % tile_b == 0)
    params: list of (w [Din, Dout] in matmul_dtype, b [1, Dout] f32)
    """
    b_tot, d0 = x.shape
    d_last = params[-1][0].shape[1]
    n_tiles = b_tot // tile_b

    # Activation: tiled over the batch grid (full-dim feature block -> legal
    # even when D0 is not a multiple of 128, so no wrapper padding copy).
    in_specs = [pl.BlockSpec((tile_b, d0), lambda i: (i, 0))]
    flat_args = []
    # Weights / biases: full-array blocks with constant block index -> resident
    # across the whole grid.  (If pl.Buffered(1) is available in the deployed
    # JAX, it would halve their pipeline-buffer footprint; omitted for safety.)
    for (w, b) in params:
        din, dout = w.shape
        in_specs.append(pl.BlockSpec((din, dout), lambda i: (0, 0)))
        in_specs.append(pl.BlockSpec((1, dout), lambda i: (0, 0)))
        flat_args += [w, b]

    kernel = functools.partial(
        _fused_layer_kernel,
        relus=tuple(bool(r) for r in relus),
        matmul_dtype=matmul_dtype,
    )
    return pl.pallas_call(
        kernel,
        out_shape=jax.ShapeDtypeStruct((b_tot, d_last), jnp.float32),
        grid_spec=pl.GridSpec(
            grid=(n_tiles,),
            in_specs=in_specs,
            out_specs=pl.BlockSpec((tile_b, d_last), lambda i: (i, 0)),
        ),
        compiler_params=pltpu.CompilerParams(
            dimension_semantics=("parallel",),     # shard batch tiles across TCs
            vmem_limit_bytes=vmem_limit_bytes,
        ),
    )(x, *flat_args)


# ----------------------------------------------------------------------------
# Single-device analogue of Weight_Parallelized_Subdomain
# ----------------------------------------------------------------------------
class WeightParallelizedSubdomainPallas:
    """Holds one pipeline-stage "layer" (a Linear[+ReLU] stack) and mirrors the
    PyTorch module's forward contract: outputs = layer(inputs), with f-eval
    counting and timing.  The layer runs as a single fused Pallas kernel."""

    def __init__(self, stage_dims, key, *, use_bf16_matmul=True):
        # stage_dims: list of (d_in, d_out, apply_relu).
        self.stage_dims = list(stage_dims)
        self.relus = tuple(bool(r) for (_, _, r) in stage_dims)
        # bf16 matmul operands (f32 accumulation) by default: native MXU rate
        # on v5e/v6e/v7x and half the weight DMA bytes.
        self.matmul_dtype = jnp.bfloat16 if use_bf16_matmul else jnp.float32

        self.params = []          # true f32 params (reference / export)
        self.params_kernel = []   # (w in matmul_dtype, b [1,Dout] f32) for the kernel
        for (d_in, d_out, _) in stage_dims:
            key, kw, kb = jax.random.split(key, 3)
            # PyTorch nn.Linear default init: U(-1/sqrt(fan_in), 1/sqrt(fan_in))
            bound = 1.0 / math.sqrt(d_in)
            w = jax.random.uniform(kw, (d_in, d_out), jnp.float32,
                                   minval=-bound, maxval=bound)
            b = jax.random.uniform(kb, (d_out,), jnp.float32,
                                   minval=-bound, maxval=bound)
            self.params.append((w, b))
            self.params_kernel.append(
                (w.astype(self.matmul_dtype), b.reshape(1, d_out)))

        # Bookkeeping mirroring the PyTorch module.
        self.inputs = None
        self.outputs = None
        self.num_f_evals = 0
        self.num_g_evals = 0
        self.f_time = 0.0
        self.g_time = 0.0
        # TODO(synk): backward()/grad()/grad_norm() (autograd.grad w.r.t. the
        # pipeline's grad_output) and the dist send/recv plumbing are not part
        # of the forward kernel; use jax.vjp on the jitted forward if needed.

        self._jit_forward = jax.jit(self._forward_impl)

    # ---- tiling / VMEM budget -------------------------------------------
    def _pick_tile_and_budget(self, batch, d0, d_last):
        # Big tile amortizes the ~0.35 us/step pipeline overhead, but keep at
        # least 2 grid tiles so the "parallel" batch axis can shard across the
        # two TensorCores of a v7x chip.
        if batch <= 16:
            tile_b = _round_up(batch, 8)
        else:
            tile_b = min(TILE_B_MAX, _round_up(-(-batch // 2), 8))

        wb_bytes = sum(w.size * w.dtype.itemsize + b.size * b.dtype.itemsize
                       for (w, b) in self.params_kernel)
        widest = max([d0, d_last] + [w.shape[1] for (w, _) in self.params_kernel])

        def estimate(tb):
            est = 2 * wb_bytes                 # resident weights (pipeline bufs)
            est += 2 * tb * d0 * 4             # x tile double buffer
            est += 2 * tb * d_last * 4         # out tile double buffer
            est += 4 * tb * widest * 4         # in-kernel f32 activation temporaries
            return est

        while tile_b > 8 and estimate(tile_b) > _VMEM_SOFT_BUDGET:
            tile_b = max(8, _round_up(tile_b // 2, 8))
        est = estimate(tile_b)
        if est > _VMEM_SOFT_BUDGET:
            # TODO(synk): for very wide layers, fall back to a (batch, N, K)
            # grid with an f32 VMEM accumulator (pl.when init/finalize) instead
            # of fully-resident weights.
            raise NotImplementedError(
                f"resident-weight strategy needs ~{est / _MiB:.1f} MiB VMEM; "
                "a K/N-tiled fallback is required for layers this wide")
        vmem_limit = int(min(64 * _MiB, max(2 * est, 32 * _MiB)))
        return tile_b, vmem_limit

    # ---- forward plumbing ------------------------------------------------
    def _forward_impl(self, x):
        batch, d0 = x.shape
        d_last = self.stage_dims[-1][1]
        tile_b, vmem_limit = self._pick_tile_and_budget(batch, d0, d_last)

        b_pad = _round_up(batch, tile_b)
        if b_pad != batch:
            # Only pad when the batch does not divide the tile; the common path
            # feeds x straight through with NO wrapper-side HBM copy.
            x_in = jnp.zeros((b_pad, d0), x.dtype).at[:batch].set(x)
        else:
            x_in = x

        out = fused_layer(x_in, self.params_kernel, self.relus, tile_b,
                          matmul_dtype=self.matmul_dtype,
                          vmem_limit_bytes=vmem_limit)
        if b_pad != batch:
            out = out[:batch]
        return out

    def forward(self, count_f=True):
        start = time.time()
        # block_until_ready so f_time records execution, not async dispatch.
        self.outputs = jax.block_until_ready(self._jit_forward(self.inputs))
        if count_f:
            self.num_f_evals += 1
        self.f_time += time.time() - start
        return self.outputs

    # Pure-JAX references for correctness checking.
    def forward_ref(self, x, *, match_kernel_precision=True):
        out = x
        for (w, b), relu in zip(self.params, self.relus):
            if match_kernel_precision:
                # Mirror the kernel numerics: cast operands to the matmul dtype,
                # accumulate in f32, f32 bias/ReLU epilogue.
                out = jnp.dot(out.astype(self.matmul_dtype),
                              w.astype(self.matmul_dtype),
                              preferred_element_type=jnp.float32) + b
            else:
                out = jnp.dot(out, w, precision=jax.lax.Precision.HIGHEST) + b
            if relu:
                out = jnp.maximum(out, 0.0)
        return out


if __name__ == "__main__":
    key = jax.random.PRNGKey(0)
    key, kx = jax.random.split(key)

    # This rank's subdomain layer = Sequential(Linear(32,64)+ReLU,
    # Linear(64,64)+ReLU, Linear(64,16)); all stages fused in one kernel.
    stage_dims = [(32, 64, True), (64, 64, True), (64, 16, False)]
    sub = WeightParallelizedSubdomainPallas(stage_dims, key)   # bf16 MXU path

    batch = 256                       # -> tile_b=128, grid=(2,) parallel tiles
    x = jax.random.normal(kx, (batch, 32), dtype=jnp.float32)

    sub.inputs = x                    # stands in for the pipeline recv
    out = sub.forward()               # outputs = layer(inputs)
    out = jax.block_until_ready(out)

    assert out.shape == (batch, 16), out.shape
    assert sub.num_f_evals == 1

    ref_same = sub.forward_ref(x, match_kernel_precision=True)   # same numerics
    ref_f32 = sub.forward_ref(x, match_kernel_precision=False)   # full-f32 ref
    assert jnp.allclose(out, ref_same, atol=5e-3, rtol=5e-3), \
        "mismatch vs precision-matched reference"
    assert jnp.allclose(out, ref_f32, atol=5e-2, rtol=5e-2), \
        "mismatch vs f32 reference"

    print("KERNEL_OK")
</pallas_src>

<mosaic_0001>
module attributes {stable_mosaic.version = 11 : i64} {
  func.func @_fused_layer_kernel(%arg0: i32, %arg1: memref<128x32xf32, #tpu.memory_space<vmem>>, %arg2: memref<32x64xbf16, #tpu.memory_space<vmem>>, %arg3: memref<1x64xf32, #tpu.memory_space<vmem>>, %arg4: memref<64x64xbf16, #tpu.memory_space<vmem>>, %arg5: memref<1x64xf32, #tpu.memory_space<vmem>>, %arg6: memref<64x16xbf16, #tpu.memory_space<vmem>>, %arg7: memref<1x16xf32, #tpu.memory_space<vmem>>, %arg8: memref<128x16xf32, #tpu.memory_space<vmem>>) attributes {dimension_semantics = [#tpu.dimension_semantics<parallel>], iteration_bounds = array<i64: 2>, scalar_prefetch = 0 : i64, scratch_operands = 0 : i64, tpu.core_type = #tpu.core_type<tc>, window_params = [{transform_indices = @transform_0, window_bounds = array<i64: 128, 32>}, {pipeline_mode = #tpu.pipeline_mode<synchronous>, transform_indices = @transform_1, window_bounds = array<i64: 32, 64>}, {pipeline_mode = #tpu.pipeline_mode<synchronous>, transform_indices = @transform_2, window_bounds = array<i64: 1, 64>}, {pipeline_mode = #tpu.pipeline_mode<synchronous>, transform_indices = @transform_3, window_bounds = array<i64: 64, 64>}, {pipeline_mode = #tpu.pipeline_mode<synchronous>, transform_indices = @transform_4, window_bounds = array<i64: 1, 64>}, {pipeline_mode = #tpu.pipeline_mode<synchronous>, transform_indices = @transform_5, window_bounds = array<i64: 64, 16>}, {pipeline_mode = #tpu.pipeline_mode<synchronous>, transform_indices = @transform_6, window_bounds = array<i64: 1, 16>}, {transform_indices = @transform_7, window_bounds = array<i64: 128, 16>}]} {
    %c0 = arith.constant 0 : index
    %c0_0 = arith.constant 0 : index
    %0 = vector.load %arg1[%c0, %c0_0] : memref<128x32xf32, #tpu.memory_space<vmem>>, vector<128x32xf32>
    %c0_1 = arith.constant 0 : index
    %c0_2 = arith.constant 0 : index
    %1 = vector.load %arg2[%c0_1, %c0_2] : memref<32x64xbf16, #tpu.memory_space<vmem>>, vector<32x64xbf16>
    %c0_3 = arith.constant 0 : index
    %c0_4 = arith.constant 0 : index
    %2 = vector.load %arg3[%c0_3, %c0_4] : memref<1x64xf32, #tpu.memory_space<vmem>>, vector<1x64xf32>
    %3 = arith.truncf %0 : vector<128x32xf32> to vector<128x32xbf16>
    %cst = arith.constant dense<0.000000e+00> : vector<128x64xf32>
    %4 = tpu.matmul %3, %1, %cst {dimension_numbers = #tpu.dot_dimension_numbers<[1], [0], [0], [1], [0, 0, 1, 1], [], []>} : vector<128x32xbf16>, vector<32x64xbf16>, vector<128x64xf32> -> vector<128x64xf32>
    %5 = vector.broadcast %2 : vector<1x64xf32> to vector<128x64xf32>
    %6 = arith.addf %4, %5 : vector<128x64xf32>
    %cst_5 = arith.constant 0.000000e+00 : f32
    %7 = vector.broadcast %cst_5 : f32 to vector<128x64xf32>
    %8 = arith.maximumf %6, %7 : vector<128x64xf32>
    %c0_6 = arith.constant 0 : index
    %c0_7 = arith.constant 0 : index
    %9 = vector.load %arg4[%c0_6, %c0_7] : memref<64x64xbf16, #tpu.memory_space<vmem>>, vector<64x64xbf16>
    %c0_8 = arith.constant 0 : index
    %c0_9 = arith.constant 0 : index
    %10 = vector.load %arg5[%c0_8, %c0_9] : memref<1x64xf32, #tpu.memory_space<vmem>>, vector<1x64xf32>
    %11 = arith.truncf %8 : vector<128x64xf32> to vector<128x64xbf16>
    %cst_10 = arith.constant dense<0.000000e+00> : vector<128x64xf32>
    %12 = tpu.matmul %11, %9, %cst_10 {dimension_numbers = #tpu.dot_dimension_numbers<[1], [0], [0], [1], [0, 0, 1, 1], [], []>} : vector<128x64xbf16>, vector<64x64xbf16>, vector<128x64xf32> -> vector<128x64xf32>
    %13 = vector.broadcast %10 : vector<1x64xf32> to vector<128x64xf32>
    %14 = arith.addf %12, %13 : vector<128x64xf32>
    %cst_11 = arith.constant 0.000000e+00 : f32
    %15 = vector.broadcast %cst_11 : f32 to vector<128x64xf32>
    %16 = arith.maximumf %14, %15 : vector<128x64xf32>
    %c0_12 = arith.constant 0 : index
    %c0_13 = arith.constant 0 : index
    %17 = vector.load %arg6[%c0_12, %c0_13] : memref<64x16xbf16, #tpu.memory_space<vmem>>, vector<64x16xbf16>
    %c0_14 = arith.constant 0 : index
    %c0_15 = arith.constant 0 : index
    %18 = vector.load %arg7[%c0_14, %c0_15] : memref<1x16xf32, #tpu.memory_space<vmem>>, vector<1x16xf32>
    %19 = arith.truncf %16 : vector<128x64xf32> to vector<128x64xbf16>
    %cst_16 = arith.constant dense<0.000000e+00> : vector<128x16xf32>
    %20 = tpu.matmul %19, %17, %cst_16 {dimension_numbers = #tpu.dot_dimension_numbers<[1], [0], [0], [1], [0, 0, 1, 1], [], []>} : vector<128x64xbf16>, vector<64x16xbf16>, vector<128x16xf32> -> vector<128x16xf32>
    %21 = vector.broadcast %18 : vector<1x16xf32> to vector<128x16xf32>
    %22 = arith.addf %20, %21 : vector<128x16xf32>
    %c0_17 = arith.constant 0 : index
    %c0_18 = arith.constant 0 : index
    %23 = vector.load %arg8[%c0_17, %c0_18] : memref<128x16xf32, #tpu.memory_space<vmem>>, vector<128x16xf32>
    tpu.vector_store %arg8[%c0_17, %c0_18], %22 {strides = array<i32>} : memref<128x16xf32, #tpu.memory_space<vmem>>, vector<128x16xf32>,
    return
  }
  func.func @transform_0(%arg0: i32) -> (i32, i32) {
    %c0_i32 = arith.constant 0 : i32
    %c0_i32_0 = arith.constant 0 : i32
    return %arg0, %c0_i32 : i32, i32
  }
  func.func @transform_1(%arg0: i32) -> (i32, i32) {
    %c0_i32 = arith.constant 0 : i32
    %c0_i32_0 = arith.constant 0 : i32
    %c0_i32_1 = arith.constant 0 : i32
    return %c0_i32, %c0_i32_0 : i32, i32
  }
  func.func @transform_2(%arg0: i32) -> (i32, i32) {
    %c0_i32 = arith.constant 0 : i32
    %c0_i32_0 = arith.constant 0 : i32
    %c0_i32_1 = arith.constant 0 : i32
    return %c0_i32, %c0_i32_0 : i32, i32
  }
  func.func @transform_3(%arg0: i32) -> (i32, i32) {
    %c0_i32 = arith.constant 0 : i32
    %c0_i32_0 = arith.constant 0 : i32
    %c0_i32_1 = arith.constant 0 : i32
    return %c0_i32, %c0_i32_0 : i32, i32
  }
  func.func @transform_4(%arg0: i32) -> (i32, i32) {
    %c0_i32 = arith.constant 0 : i32
    %c0_i32_0 = arith.constant 0 : i32
    %c0_i32_1 = arith.constant 0 : i32
    return %c0_i32, %c0_i32_0 : i32, i32
  }
  func.func @transform_5(%arg0: i32) -> (i32, i32) {
    %c0_i32 = arith.constant 0 : i32
    %c0_i32_0 = arith.constant 0 : i32
    %c0_i32_1 = arith.constant 0 : i32
    return %c0_i32, %c0_i32_0 : i32, i32
  }
  func.func @transform_6(%arg0: i32) -> (i32, i32) {
    %c0_i32 = arith.constant 0 : i32
    %c0_i32_0 = arith.constant 0 : i32
    %c0_i32_1 = arith.constant 0 : i32
    return %c0_i32, %c0_i32_0 : i32, i32
  }
  func.func @transform_7(%arg0: i32) -> (i32, i32) {
    %c0_i32 = arith.constant 0 : i32
    %c0_i32_0 = arith.constant 0 : i32
    return %arg0, %c0_i32 : i32, i32
  }
}

</mosaic_0001>

<llo_original>
// kernel: _forward_impl.1
$region0: #{_forward_impl.1}
  #allocation0 [shape = 'u32[]', space=smem, size = 0x4, offset = 0x4, fixed_abs, tag = 'smem constant byte address 0x4 - core index']
  #allocation1 [shape = 'u32[144,128]{1,0:T(1,128)}', space=vmem, size = 0x12000, scoped, tag = 'internal scratch']
  %s0 = inlined_call_operand.vmem [shape: f32[256,32], index: 0, kind: input, shape index: {}]
  %s1 = inlined_call_operand.vmem [shape: bf16[32,64], index: 1, kind: input, shape index: {}]
  %s2 = inlined_call_operand.vmem [shape: f32[1,64], index: 2, kind: input, shape index: {}]
  %s3 = inlined_call_operand.vmem [shape: bf16[64,64], index: 3, kind: input, shape index: {}]
  %s4 = inlined_call_operand.vmem [shape: f32[1,64], index: 4, kind: input, shape index: {}]
  %s5 = inlined_call_operand.vmem [shape: bf16[64,16], index: 5, kind: input, shape index: {}]
  %s6 = inlined_call_operand.vmem [shape: f32[1,16], index: 6, kind: input, shape index: {}]
  %s7 = inlined_call_operand.vmem [shape: f32[256,16], index: 7, kind: output, shape index: {}]
  %s8 = sld [smem:[#allocation0]]
  $region61: #{_forward_impl.1} parent=0
    _
  %s10 = ssub.s32 1, %s8
  %s11 = scalar_select 0, %s10, %s8
  loop: start=0, step=1, limit=4
  $region2: #{_forward_impl.1} parent=0 // loop_pre_header
    _
  $region3: #{_forward_impl.1} parent=0 // loop_header
    %s13 = sphi 0, %s17
    %p14 = scmp.ge.s32.totalorder %s13, 4
    %s23 = sphi 0, %s25
    %s26 = sphi 0, %s23
    %s27 = sphi 0, %s26
    %s43 = sphi 0, %s27
    %s47 = sphi 0, %s47
    %s49 = sphi 0, %s47
    %s50 = sphi 0, %s49
    %s64 = sphi 0, %s50
    %s68 = sphi 0, %s68
    %s70 = sphi 0, %s68
    %s71 = sphi 0, %s70
    %s85 = sphi 0, %s71
    %s89 = sphi 0, %s89
    %s91 = sphi 0, %s89
    %s92 = sphi 0, %s91
    %s106 = sphi 0, %s92
    %s110 = sphi 0, %s110
    %s112 = sphi 0, %s110
    %s113 = sphi 0, %s112
    %s127 = sphi 0, %s113
    %s131 = sphi 0, %s131
    %s133 = sphi 0, %s131
    %s134 = sphi 0, %s133
    %s148 = sphi 0, %s134
    %s152 = sphi 0, %s152
    %s154 = sphi 0, %s152
    %s155 = sphi 0, %s154
    %s169 = sphi 0, %s155
    %s175 = sphi 0, %s177
    %s178 = sphi 0, %s175
    %s179 = sphi 0, %s178
    %s195 = sphi 0, %s179
  $region4: #{_forward_impl.1} parent=0 // loop_header_branch
    %16 = sbr.rel (%p14) target = $region8
  $region5: #{_forward_impl.1} parent=0 // loop_body
    %s18 = ssub.s32 %s13, 1
    %s19 = ssub.s32 %s13, 2
    %s20 = sadd.s32 %s13, 1
    %s21 = ssub.s32 %s13, %s20
    %p22 = scmp.eq.s32.totalorder %s21, 0
    %s24 = sadd.s32 %s23, 1
    %s25 = scalar_select %p22, %s23, %s24
    %p28 = pneg %p22
    %p29 = scmp.eq.s32.totalorder %s13, 1
    %p30 = por %p28, %p29
    %p31 = scmp.ne.s32.totalorder %s23, %s26
    %p32 = scmp.eq.s32.totalorder %s13, 0
    %p33 = por %p31, %p32
    %p34 = scmp.ne.s32.totalorder %s23, %s26
    %p35 = scmp.eq.s32.totalorder %s18, 1
    %p36 = por %p34, %p35
    %p37 = scmp.ne.s32.totalorder %s26, %s27
    %p38 = scmp.eq.s32.totalorder %s18, 0
    %p39 = por %p37, %p38
    %p40 = scmp.ne.s32.totalorder %s26, %s27
    %p41 = scmp.eq.s32.totalorder %s19, 1
    %p42 = por %p40, %p41
    %p44 = scmp.ne.s32.totalorder %s27, %s43
    %p45 = scmp.eq.s32.totalorder %s19, 0
    %p46 = por %p44, %p45
    %s48 = sadd.s32 %s47, 1
    %p51 = scmp.eq.s32.totalorder %s13, 1
    %p52 = scmp.ne.s32.totalorder %s47, %s49
    %p53 = scmp.eq.s32.totalorder %s13, 0
    %p54 = por %p52, %p53
    %p55 = scmp.ne.s32.totalorder %s47, %s49
    %p56 = scmp.eq.s32.totalorder %s18, 1
    %p57 = por %p55, %p56
    %p58 = scmp.ne.s32.totalorder %s49, %s50
    %p59 = scmp.eq.s32.totalorder %s18, 0
    %p60 = por %p58, %p59
    %p61 = scmp.ne.s32.totalorder %s49, %s50
    %p62 = scmp.eq.s32.totalorder %s19, 1
    %p63 = por %p61, %p62
    %p65 = scmp.ne.s32.totalorder %s50, %s64
    %p66 = scmp.eq.s32.totalorder %s19, 0
    %p67 = por %p65, %p66
    %s69 = sadd.s32 %s68, 1
    %p72 = scmp.eq.s32.totalorder %s13, 1
    %p73 = scmp.ne.s32.totalorder %s68, %s70
    %p74 = scmp.eq.s32.totalorder %s13, 0
    %p75 = por %p73, %p74
    %p76 = scmp.ne.s32.totalorder %s68, %s70
    %p77 = scmp.eq.s32.totalorder %s18, 1
    %p78 = por %p76, %p77
    %p79 = scmp.ne.s32.totalorder %s70, %s71
    %p80 = scmp.eq.s32.totalorder %s18, 0
    %p81 = por %p79, %p80
    %p82 = scmp.ne.s32.totalorder %s70, %s71
    %p83 = scmp.eq.s32.totalorder %s19, 1
    %p84 = por %p82, %p83
    %p86 = scmp.ne.s32.totalorder %s71, %s85
    %p87 = scmp.eq.s32.totalorder %s19, 0
    %p88 = por %p86, %p87
    %s90 = sadd.s32 %s89, 1
    %p93 = scmp.eq.s32.totalorder %s13, 1
    %p94 = scmp.ne.s32.totalorder %s89, %s91
    %p95 = scmp.eq.s32.totalorder %s13, 0
    %p96 = por %p94, %p95
    %p97 = scmp.ne.s32.totalorder %s89, %s91
    %p98 = scmp.eq.s32.totalorder %s18, 1
    %p99 = por %p97, %p98
    %p100 = scmp.ne.s32.totalorder %s91, %s92
    %p101 = scmp.eq.s32.totalorder %s18, 0
    %p102 = por %p100, %p101
    %p103 = scmp.ne.s32.totalorder %s91, %s92
    %p104 = scmp.eq.s32.totalorder %s19, 1
    %p105 = por %p103, %p104
    %p107 = scmp.ne.s32.totalorder %s92, %s106
    %p108 = scmp.eq.s32.totalorder %s19, 0
    %p109 = por %p107, %p108
    %s111 = sadd.s32 %s110, 1
    %p114 = scmp.eq.s32.totalorder %s13, 1
    %p115 = scmp.ne.s32.totalorder %s110, %s112
    %p116 = scmp.eq.s32.totalorder %s13, 0
    %p117 = por %p115, %p116
    %p118 = scmp.ne.s32.totalorder %s110, %s112
    %p119 = scmp.eq.s32.totalorder %s18, 1
    %p120 = por %p118, %p119
    %p121 = scmp.ne.s32.totalorder %s112, %s113
    %p122 = scmp.eq.s32.totalorder %s18, 0
    %p123 = por %p121, %p122
    %p124 = scmp.ne.s32.totalorder %s112, %s113
    %p125 = scmp.eq.s32.totalorder %s19, 1
    %p126 = por %p124, %p125
    %p128 = scmp.ne.s32.totalorder %s113, %s127
    %p129 = scmp.eq.s32.totalorder %s19, 0
    %p130 = por %p128, %p129
    %s132 = sadd.s32 %s131, 1
    %p135 = scmp.eq.s32.totalorder %s13, 1
    %p136 = scmp.ne.s32.totalorder %s131, %s133
    %p137 = scmp.eq.s32.totalorder %s13, 0
    %p138 = por %p136, %p137
    %p139 = scmp.ne.s32.totalorder %s131, %s133
    %p140 = scmp.eq.s32.totalorder %s18, 1
    %p141 = por %p139, %p140
    %p142 = scmp.ne.s32.totalorder %s133, %s134
    %p143 = scmp.eq.s32.totalorder %s18, 0
    %p144 = por %p142, %p143
    %p145 = scmp.ne.s32.totalorder %s133, %s134
    %p146 = scmp.eq.s32.totalorder %s19, 1
    %p147 = por %p145, %p146
    %p149 = scmp.ne.s32.totalorder %s134, %s148
    %p150 = scmp.eq.s32.totalorder %s19, 0
    %p151 = por %p149, %p150
    %s153 = sadd.s32 %s152, 1
    %p156 = scmp.eq.s32.totalorder %s13, 1
    %p157 = scmp.ne.s32.totalorder %s152, %s154
    %p158 = scmp.eq.s32.totalorder %s13, 0
    %p159 = por %p157, %p158
    %p160 = scmp.ne.s32.totalorder %s152, %s154
    %p161 = scmp.eq.s32.totalorder %s18, 1
    %p162 = por %p160, %p161
    %p163 = scmp.ne.s32.totalorder %s154, %s155
    %p164 = scmp.eq.s32.totalorder %s18, 0
    %p165 = por %p163, %p164
    %p166 = scmp.ne.s32.totalorder %s154, %s155
    %p167 = scmp.eq.s32.totalorder %s19, 1
    %p168 = por %p166, %p167
    %p170 = scmp.ne.s32.totalorder %s155, %s169
    %p171 = scmp.eq.s32.totalorder %s19, 0
    %p172 = por %p170, %p171
    %s173 = ssub.s32 %s13, %s20
    %p174 = scmp.eq.s32.totalorder %s173, 0
    %s176 = sadd.s32 %s175, 1
    %s177 = scalar_select %p174, %s175, %s176
    %p180 = pneg %p174
    %p181 = scmp.eq.s32.totalorder %s13, 1
    %p182 = por %p180, %p181
    %p183 = scmp.ne.s32.totalorder %s175, %s178
    %p184 = scmp.eq.s32.totalorder %s13, 0
    %p185 = por %p183, %p184
    %p186 = scmp.ne.s32.totalorder %s175, %s178
    %p187 = scmp.eq.s32.totalorder %s18, 1
    %p188 = por %p186, %p187
    %p189 = scmp.ne.s32.totalorder %s178, %s179
    %p190 = scmp.eq.s32.totalorder %s18, 0
    %p191 = por %p189, %p190
    %p192 = scmp.ne.s32.totalorder %s178, %s179
    %p193 = scmp.eq.s32.totalorder %s19, 1
    %p194 = por %p192, %p193
    %p196 = scmp.ne.s32.totalorder %s179, %s195
    %p197 = scmp.eq.s32.totalorder %s19, 0
    %p198 = por %p196, %p197
    %p199 = scmp.le.s32.totalorder 1, %s13
    %p200 = scmp.lt.s32.totalorder %s13, 3
    %p201 = pnand %p199, %p200
    %p202 = pneg %p201
    // Predicated region
    $region9: #{_forward_impl.1} parent=5 // pred_check
      _
    $region10: #{_forward_impl.1} parent=5 // pred_check_branch
      %204 = sbr.rel (%p201) target = $region12
    $region11: #{_forward_impl.1} parent=5 // pred_region
      %s205 = ssub.s32 %s13, 1
      // Predicated region
      $region13: #{_forward_impl.1} parent=11 // pred_check
        %p206 = pneg %p60
      $region14: #{_forward_impl.1} parent=11 // pred_check_branch
        %208 = sbr.rel (%p206) target = $region16
      $region15: #{_forward_impl.1} parent=11 // pred_region
        _
      $region16: #{_forward_impl.1} parent=11 // pred_fallthru
        _
      // Predicated region
      $region17: #{_forward_impl.1} parent=11 // pred_check
        %p209 = pneg %p81
      $region18: #{_forward_impl.1} parent=11 // pred_check_branch
        %211 = sbr.rel (%p209) target = $region20
      $region19: #{_forward_impl.1} parent=11 // pred_region
        _
      $region20: #{_forward_impl.1} parent=11 // pred_fallthru
        _
      // Predicated region
      $region21: #{_forward_impl.1} parent=11 // pred_check
        %p212 = pneg %p102
      $region22: #{_forward_impl.1} parent=11 // pred_check_branch
        %214 = sbr.rel (%p212) target = $region24
      $region23: #{_forward_impl.1} parent=11 // pred_region
        _
      $region24: #{_forward_impl.1} parent=11 // pred_fallthru
        _
      // Predicated region
      $region25: #{_forward_impl.1} parent=11 // pred_check
        %p215 = pneg %p123
      $region26: #{_forward_impl.1} parent=11 // pred_check_branch
        %217 = sbr.rel (%p215) target = $region28
      $region27: #{_forward_impl.1} parent=11 // pred_region
        _
      $region28: #{_forward_impl.1} parent=11 // pred_fallthru
        _
      // Predicated region
      $region29: #{_forward_impl.1} parent=11 // pred_check
        %p218 = pneg %p144
      $region30: #{_forward_impl.1} parent=11 // pred_check_branch
        %220 = sbr.rel (%p218) target = $region32
      $region31: #{_forward_impl.1} parent=11 // pred_region
        _
      $region32: #{_forward_impl.1} parent=11 // pred_fallthru
        _
      // Predicated region
      $region33: #{_forward_impl.1} parent=11 // pred_check
        %p221 = pneg %p165
      $region34: #{_forward_impl.1} parent=11 // pred_check_branch
        %223 = sbr.rel (%p221) target = $region36
      $region35: #{_forward_impl.1} parent=11 // pred_region
        _
      $region36: #{_forward_impl.1} parent=11 // pred_fallthru
        _
    $region12: #{_forward_impl.1} parent=5 // pred_fallthru
      _
    %p224 = scmp.lt.s32.totalorder %s13, 2
    // Predicated region
    $region37: #{_forward_impl.1} parent=5 // pred_check
      %p225 = pneg %p224
    $region38: #{_forward_impl.1} parent=5 // pred_check_branch
      %227 = sbr.rel (%p225) target = $region40
    $region39: #{_forward_impl.1} parent=5 // pred_region
      // Predicated region
      $region41: #{_forward_impl.1} parent=39 // pred_check
        %p228 = pneg %p33
      $region42: #{_forward_impl.1} parent=39 // pred_check_branch
        %230 = sbr.rel (%p228) target = $region44
      $region43: #{_forward_impl.1} parent=39 // pred_region
        %s231 = smul.u32 16, %s13
        %p232 = scmp.lt.s32.totalorder %s231, 31
        %s233 = scalar_select %p232, %s231, 31
        %s234 = smul.addr %s233, 8
        %s235 = scalar_lea.vmem %s0, %s234
        %s236 = smul.u32 16, %s13
      $region44: #{_forward_impl.1} parent=39 // pred_fallthru
        _
    $region40: #{_forward_impl.1} parent=5 // pred_fallthru
      _
    %p237 = scmp.le.s32.totalorder 1, %s13
    %p238 = scmp.lt.s32.totalorder %s13, 3
    %p239 = pnand %p237, %p238
    %p240 = pneg %p239
    // Predicated region
    $region45: #{_forward_impl.1} parent=5 // pred_check
      _
    $region46: #{_forward_impl.1} parent=5 // pred_check_branch
      %242 = sbr.rel (%p239) target = $region48
    $region47: #{_forward_impl.1} parent=5 // pred_region
      %s243 = ssub.s32 %s13, 1
      %s244 = smul.u32 16, %s18
      %p245 = scmp.lt.s32.totalorder %s244, 31
      %s246 = scalar_select %p245, %s244, 31
      %s247 = smul.addr %s246, 8
      %s248 = scalar_lea.vmem %s0, %s247
      %p249 = pneg %p39
      %p250 = pneg %p36
      %p251 = pneg %p60
      %p252 = pneg %p57
      %p253 = pneg %p81
      %p254 = pneg %p78
      %p255 = pneg %p102
      %p256 = pneg %p99
      %p257 = pneg %p123
      %p258 = pneg %p120
      %p259 = pneg %p144
      %p260 = pneg %p141
      %p261 = pneg %p165
      %p262 = pneg %p162
      %p263 = pneg %p191
      %p264 = pneg %p188
      %s265 = smul.u32 16, %s18
      %p266 = scmp.lt.s32.totalorder %s265, 31
      %s267 = scalar_select %p266, %s265, 31
      %s268 = smul.addr %s267, 8
      %s269 = scalar_lea.vmem %s7, %s268
      %s270 = smul.u32 16, %s18
      %p271 = scmp.lt.s32.totalorder %s270, 31
      %s272 = scalar_select %p271, %s270, 31
      %s273 = smul.addr %s272, 8
      %s274 = scalar_lea.vmem %s0, %s273
      %s275 = smul.u32 16, %s18
      %s276 = smul.u32 16, %s18
      %p277 = scmp.lt.s32.totalorder %s276, 31
      %s278 = scalar_select %p277, %s276, 31
      %s279 = smul.addr %s278, 8
      %s280 = scalar_lea.vmem %s7, %s279
      %s281 = smul.u32 16, %s18
      %v283 = vld [vmem:[%s274] sm:$0xff]
      %v284 = vld [vmem:[%s274 + $0x8] sm:$0xff]
      %v285 = vld [vmem:[%s274 + $0x10] sm:$0xff]
      %v286 = vld [vmem:[%s274 + $0x18] sm:$0xff]
      %v287 = vld [vmem:[%s274 + $0x20] sm:$0xff]
      %v288 = vld [vmem:[%s274 + $0x28] sm:$0xff]
      %v289 = vld [vmem:[%s274 + $0x30] sm:$0xff]
      %v290 = vld [vmem:[%s274 + $0x38] sm:$0xff]
      %v291 = vld [vmem:[%s274 + $0x40] sm:$0xff]
      %v292 = vld [vmem:[%s274 + $0x48] sm:$0xff]
      %v293 = vld [vmem:[%s274 + $0x50] sm:$0xff]
      %v294 = vld [vmem:[%s274 + $0x58] sm:$0xff]
      %v295 = vld [vmem:[%s274 + $0x60] sm:$0xff]
      %v296 = vld [vmem:[%s274 + $0x68] sm:$0xff]
      %v297 = vld [vmem:[%s274 + $0x70] sm:$0xff]
      %v298 = vld [vmem:[%s274 + $0x78] sm:$0xff]
      %v299 = vld [vmem:[%s1] sm:$0xf]
      %v300 = vld [vmem:[%s1 + $0x4] sm:$0xf]
      %v301 = vld [vmem:[%s1 + $0x8] sm:$0xf]
      %v302 = vld [vmem:[%s1 + $0xc] sm:$0xf]
      %v303 = vld [vmem:[%s2] sm:$0x1]
      %v304 = vpack.c.bf16 %v284, %v283
      %v305 = vpack.c.bf16 %v286, %v285
      %v306 = vpack.c.bf16 %v288, %v287
      %v307 = vpack.c.bf16 %v290, %v289
      %v308 = vpack.c.bf16 %v292, %v291
      %v309 = vpack.c.bf16 %v294, %v293
      %v310 = vpack.c.bf16 %v296, %v295
      %v311 = vpack.c.bf16 %v298, %v297
      %v313 = vlaneseq
      %v314 = vshrl.u32 %v313, 7
      %v315 = vsub.s32 0, %v314
      %v316 = vrot.slane %v303, %v315
      %v322 = vunpack.c.l.b16 %v299
      %v323 = vunpack.c.l.b16 %v300
      %v324 = vunpack.c.l.b16 %v301
      %v325 = vunpack.c.l.b16 %v302
      %v326 = vpack.c.b16 %v323, %v322
      %v327 = vpack.c.b16 %v325, %v324
      %vm330 = vcmask 261120
      %v332 = vsel %vm330, %v304, 0
      %v335 = vsel %vm330, %v305, 0
      %v338 = vsel %vm330, %v306, 0
      %v341 = vsel %vm330, %v307, 0
      %v344 = vsel %vm330, %v308, 0
      %v347 = vsel %vm330, %v309, 0
      %v350 = vsel %vm330, %v310, 0
      %v353 = vsel %vm330, %v311, 0
      %355 = vmatprep.subr.bf16.mxu0 0
      %356 = vmatpush1.bf16.msra.mxu0 %v326
      %357 = vmatprep.subr.bf16.mxu0 0
      %358 = vmatpush1.bf16.msra.mxu0 %v327
      %359 = vmatprep.subr.bf16.mxu0 0
      %360 = vmatpush1.bf16.msra.mxu0 0
      %361 = vmatprep.subr.bf16.mxu0 0
      %362 = vmatpush1.bf16.msra.mxu0 0
      %363 = vmatprep.subr.bf16.mxu0 0
      %364 = vmatpush1.bf16.msra.mxu0 0
      %365 = vmatprep.subr.bf16.mxu0 0
      %366 = vmatpush1.bf16.msra.mxu0 0
      %367 = vmatprep.subr.bf16.mxu0 0
      %368 = vmatpush1.bf16.msra.mxu0 0
      %369 = vmatprep.subr.bf16.mxu0 0
      %370 = vmatpush1.bf16.msra.mxu0 0
      %371 = vmatprep.subr.bf16.mxu0 0
      %372 = vmatpush1.bf16.msra.mxu0 0
      %373 = vmatprep.subr.bf16.mxu0 0
      %374 = vmatpush1.bf16.msra.mxu0 0
      %375 = vmatprep.subr.bf16.mxu0 0
      %376 = vmatpush1.bf16.msra.mxu0 0
      %377 = vmatprep.subr.bf16.mxu0 0
      %378 = vmatpush1.bf16.msra.mxu0 0
      %379 = vmatprep.subr.bf16.mxu0 0
      %380 = vmatpush1.bf16.msra.mxu0 0
      %381 = vmatprep.subr.bf16.mxu0 0
      %382 = vmatpush1.bf16.msra.mxu0 0
      %383 = vmatprep.subr.bf16.mxu0 0
      %384 = vmatpush1.bf16.msra.mxu0 0
      %385 = vmatprep.subr.bf16.mxu0 0
      %386 = vmatpush1.bf16.msra.mxu0 0
      %387 = vmatprep.mubr.bf16.mxu0 0
      %388 = vmatmul.mubr.bf16.gmra.mrb[0].mxu0 %v332
      %v389 = vpop.f32.mrb[0].mxu0
      %v390 = vadd.f32 %v316, %v389
      %v391 = vpop.f32.mrb[0].mxu0
      %v392 = vpop.f32.mrb[0].mxu0
      %v393 = vadd.f32 %v316, %v392
      %v394 = vpop.f32.mrb[0].mxu0
      %395 = vmatprep.mubr.bf16.mxu0 0
      %396 = vmatmul.mubr.bf16.gmra.mrb[0].mxu0 %v335
      %v397 = vpop.f32.mrb[0].mxu0
      %v398 = vadd.f32 %v316, %v397
      %v399 = vpop.f32.mrb[0].mxu0
      %v400 = vpop.f32.mrb[0].mxu0
      %v401 = vadd.f32 %v316, %v400
      %v402 = vpop.f32.mrb[0].mxu0
      %403 = vmatprep.mubr.bf16.mxu0 0
      %404 = vmatmul.mubr.bf16.gmra.mrb[0].mxu0 %v338
      %v405 = vpop.f32.mrb[0].mxu0
      %v406 = vadd.f32 %v316, %v405
      %v407 = vpop.f32.mrb[0].mxu0
      %v408 = vpop.f32.mrb[0].mxu0
      %v409 = vadd.f32 %v316, %v408
      %v410 = vpop.f32.mrb[0].mxu0
      %411 = vmatprep.mubr.bf16.mxu0 0
      %412 = vmatmul.mubr.bf16.gmra.mrb[0].mxu0 %v341
      %v413 = vpop.f32.mrb[0].mxu0
      %v414 = vadd.f32 %v316, %v413
      %v415 = vpop.f32.mrb[0].mxu0
      %v416 = vpop.f32.mrb[0].mxu0
      %v417 = vadd.f32 %v316, %v416
      %v418 = vpop.f32.mrb[0].mxu0
      %419 = vmatprep.mubr.bf16.mxu0 0
      %420 = vmatmul.mubr.bf16.gmra.mrb[0].mxu0 %v344
      %v421 = vpop.f32.mrb[0].mxu0
      %v422 = vadd.f32 %v316, %v421
      %v423 = vpop.f32.mrb[0].mxu0
      %v424 = vpop.f32.mrb[0].mxu0
      %v425 = vadd.f32 %v316, %v424
      %v426 = vpop.f32.mrb[0].mxu0
      %427 = vmatprep.mubr.bf16.mxu0 0
      %428 = vmatmul.mubr.bf16.gmra.mrb[0].mxu0 %v347
      %v429 = vpop.f32.mrb[0].mxu0
      %v430 = vadd.f32 %v316, %v429
      %v431 = vpop.f32.mrb[0].mxu0
      %v432 = vpop.f32.mrb[0].mxu0
      %v433 = vadd.f32 %v316, %v432
      %v434 = vpop.f32.mrb[0].mxu0
      %435 = vmatprep.mubr.bf16.mxu0 0
      %436 = vmatmul.mubr.bf16.gmra.mrb[0].mxu0 %v350
      %v437 = vpop.f32.mrb[0].mxu0
      %v438 = vadd.f32 %v316, %v437
      %v439 = vpop.f32.mrb[0].mxu0
      %v440 = vpop.f32.mrb[0].mxu0
      %v441 = vadd.f32 %v316, %v440
      %v442 = vpop.f32.mrb[0].mxu0
      %443 = vmatprep.mubr.bf16.mxu0 0
      %444 = vmatmul.mubr.bf16.gmra.mrb[0].mxu0 %v353
      %v445 = vpop.f32.mrb[0].mxu0
      %v446 = vadd.f32 %v316, %v445
      %v447 = vpop.f32.mrb[0].mxu0
      %v448 = vpop.f32.mrb[0].mxu0
      %v449 = vadd.f32 %v316, %v448
      %v450 = vpop.f32.mrb[0].mxu0
      %451 = vdwg.mxu0
      %v452 = vmax.f32 %v390, 0.0
      %v453 = vmax.f32 %v393, 0.0
      %v454 = vmax.f32 %v398, 0.0
      %v455 = vmax.f32 %v401, 0.0
      %v456 = vmax.f32 %v406, 0.0
      %v457 = vmax.f32 %v409, 0.0
      %v458 = vmax.f32 %v414, 0.0
      %v459 = vmax.f32 %v417, 0.0
      %v460 = vmax.f32 %v422, 0.0
      %v461 = vmax.f32 %v425, 0.0
      %v462 = vmax.f32 %v430, 0.0
      %v463 = vmax.f32 %v433, 0.0
      %v464 = vmax.f32 %v438, 0.0
      %v465 = vmax.f32 %v441, 0.0
      %v466 = vmax.f32 %v446, 0.0
      %v467 = vmax.f32 %v449, 0.0
      %v468 = vld [vmem:[%s3] sm:$0xf]
      %v469 = vld [vmem:[%s3 + $0x4] sm:$0xf]
      %v470 = vld [vmem:[%s3 + $0x8] sm:$0xf]
      %v471 = vld [vmem:[%s3 + $0xc] sm:$0xf]
      %v472 = vld [vmem:[%s3 + $0x10] sm:$0xf]
      %v473 = vld [vmem:[%s3 + $0x14] sm:$0xf]
      %v474 = vld [vmem:[%s3 + $0x18] sm:$0xf]
      %v475 = vld [vmem:[%s3 + $0x1c] sm:$0xf]
      %v476 = vld [vmem:[%s4] sm:$0x1]
      %v477 = vpack.c.bf16 %v453, %v452
      %v478 = vpack.c.bf16 %v455, %v454
      %v479 = vpack.c.bf16 %v457, %v456
      %v480 = vpack.c.bf16 %v459, %v458
      %v481 = vpack.c.bf16 %v461, %v460
      %v482 = vpack.c.bf16 %v463, %v462
      %v483 = vpack.c.bf16 %v465, %v464
      %v484 = vpack.c.bf16 %v467, %v466
      %v486 = vlaneseq
      %v487 = vshrl.u32 %v486, 7
      %v488 = vsub.s32 0, %v487
      %v489 = vrot.slane %v476, %v488
      %v499 = vunpack.c.l.b16 %v468
      %v500 = vunpack.c.l.b16 %v469
      %v501 = vunpack.c.l.b16 %v470
      %v502 = vunpack.c.l.b16 %v471
      %v503 = vunpack.c.l.b16 %v472
      %v504 = vunpack.c.l.b16 %v473
      %v505 = vunpack.c.l.b16 %v474
      %v506 = vunpack.c.l.b16 %v475
      %v507 = vpack.c.b16 %v500, %v499
      %v508 = vpack.c.b16 %v502, %v501
      %v509 = vpack.c.b16 %v504, %v503
      %v510 = vpack.c.b16 %v506, %v505
      %vm515 = vcmask 523264
      %v517 = vsel %vm515, %v477, 0
      %v520 = vsel %vm515, %v478, 0
      %v523 = vsel %vm515, %v479, 0
      %v526 = vsel %vm515, %v480, 0
      %v529 = vsel %vm515, %v481, 0
      %v532 = vsel %vm515, %v482, 0
      %v535 = vsel %vm515, %v483, 0
      %v538 = vsel %vm515, %v484, 0
      %540 = vmatprep.subr.bf16.mxu0 0
      %541 = vmatpush1.bf16.msra.mxu0 %v507
      %542 = vmatprep.subr.bf16.mxu0 0
      %543 = vmatpush1.bf16.msra.mxu0 %v508
      %544 = vmatprep.subr.bf16.mxu0 0
      %545 = vmatpush1.bf16.msra.mxu0 %v509
      %546 = vmatprep.subr.bf16.mxu0 0
      %547 = vmatpush1.bf16.msra.mxu0 %v510
      %548 = vmatprep.subr.bf16.mxu0 0
      %549 = vmatpush1.bf16.msra.mxu0 0
      %550 = vmatprep.subr.bf16.mxu0 0
      %551 = vmatpush1.bf16.msra.mxu0 0
      %552 = vmatprep.subr.bf16.mxu0 0
      %553 = vmatpush1.bf16.msra.mxu0 0
      %554 = vmatprep.subr.bf16.mxu0 0
      %555 = vmatpush1.bf16.msra.mxu0 0
      %556 = vmatprep.subr.bf16.mxu0 0
      %557 = vmatpush1.bf16.msra.mxu0 0
      %558 = vmatprep.subr.bf16.mxu0 0
      %559 = vmatpush1.bf16.msra.mxu0 0
      %560 = vmatprep.subr.bf16.mxu0 0
      %561 = vmatpush1.bf16.msra.mxu0 0
      %562 = vmatprep.subr.bf16.mxu0 0
      %563 = vmatpush1.bf16.msra.mxu0 0
      %564 = vmatprep.subr.bf16.mxu0 0
      %565 = vmatpush1.bf16.msra.mxu0 0
      %566 = vmatprep.subr.bf16.mxu0 0
      %567 = vmatpush1.bf16.msra.mxu0 0
      %568 = vmatprep.subr.bf16.mxu0 0
      %569 = vmatpush1.bf16.msra.mxu0 0
      %570 = vmatprep.subr.bf16.mxu0 0
      %571 = vmatpush1.bf16.msra.mxu0 0
      %572 = vmatprep.mubr.bf16.mxu0 0
      %573 = vmatmul.mubr.bf16.gmra.mrb[0].mxu0 %v517
      %v574 = vpop.f32.mrb[0].mxu0
      %v575 = vadd.f32 %v489, %v574
      %v576 = vpop.f32.mrb[0].mxu0
      %v577 = vpop.f32.mrb[0].mxu0
      %v578 = vadd.f32 %v489, %v577
      %v579 = vpop.f32.mrb[0].mxu0
      %580 = vmatprep.mubr.bf16.mxu0 0
      %581 = vmatmul.mubr.bf16.gmra.mrb[0].mxu0 %v520
      %v582 = vpop.f32.mrb[0].mxu0
      %v583 = vadd.f32 %v489, %v582
      %v584 = vpop.f32.mrb[0].mxu0
      %v585 = vpop.f32.mrb[0].mxu0
      %v586 = vadd.f32 %v489, %v585
      %v587 = vpop.f32.mrb[0].mxu0
      %588 = vmatprep.mubr.bf16.mxu0 0
      %589 = vmatmul.mubr.bf16.gmra.mrb[0].mxu0 %v523
      %v590 = vpop.f32.mrb[0].mxu0
      %v591 = vadd.f32 %v489, %v590
      %v592 = vpop.f32.mrb[0].mxu0
      %v593 = vpop.f32.mrb[0].mxu0
      %v594 = vadd.f32 %v489, %v593
      %v595 = vpop.f32.mrb[0].mxu0
      %596 = vmatprep.mubr.bf16.mxu0 0
      %597 = vmatmul.mubr.bf16.gmra.mrb[0].mxu0 %v526
      %v598 = vpop.f32.mrb[0].mxu0
      %v599 = vadd.f32 %v489, %v598
      %v600 = vpop.f32.mrb[0].mxu0
      %v601 = vpop.f32.mrb[0].mxu0
      %v602 = vadd.f32 %v489, %v601
      %v603 = vpop.f32.mrb[0].mxu0
      %604 = vmatprep.mubr.bf16.mxu0 0
      %605 = vmatmul.mubr.bf16.gmra.mrb[0].mxu0 %v529
      %v606 = vpop.f32.mrb[0].mxu0
      %v607 = vadd.f32 %v489, %v606
      %v608 = vpop.f32.mrb[0].mxu0
      %v609 = vpop.f32.mrb[0].mxu0
      %v610 = vadd.f32 %v489, %v609
      %v611 = vpop.f32.mrb[0].mxu0
      %612 = vmatprep.mubr.bf16.mxu0 0
      %613 = vmatmul.mubr.bf16.gmra.mrb[0].mxu0 %v532
      %v614 = vpop.f32.mrb[0].mxu0
      %v615 = vadd.f32 %v489, %v614
      %v616 = vpop.f32.mrb[0].mxu0
      %v617 = vpop.f32.mrb[0].mxu0
      %v618 = vadd.f32 %v489, %v617
      %v619 = vpop.f32.mrb[0].mxu0
      %620 = vmatprep.mubr.bf16.mxu0 0
      %621 = vmatmul.mubr.bf16.gmra.mrb[0].mxu0 %v535
      %v622 = vpop.f32.mrb[0].mxu0
      %v623 = vadd.f32 %v489, %v622
      %v624 = vpop.f32.mrb[0].mxu0
      %v625 = vpop.f32.mrb[0].mxu0
      %v626 = vadd.f32 %v489, %v625
      %v627 = vpop.f32.mrb[0].mxu0
      %628 = vmatprep.mubr.bf16.mxu0 0
      %629 = vmatmul.mubr.bf16.gmra.mrb[0].mxu0 %v538
      %v630 = vpop.f32.mrb[0].mxu0
      %v631 = vadd.f32 %v489, %v630
      %v632 = vpop.f32.mrb[0].mxu0
      %v633 = vpop.f32.mrb[0].mxu0
      %v634 = vadd.f32 %v489, %v633
      %v635 = vpop.f32.mrb[0].mxu0
      %636 = vdwg.mxu0
      %v637 = vmax.f32 %v575, 0.0
      %v638 = vmax.f32 %v578, 0.0
      %v639 = vmax.f32 %v583, 0.0
      %v640 = vmax.f32 %v586, 0.0
      %v641 = vmax.f32 %v591, 0.0
      %v642 = vmax.f32 %v594, 0.0
      %v643 = vmax.f32 %v599, 0.0
      %v644 = vmax.f32 %v602, 0.0
      %v645 = vmax.f32 %v607, 0.0
      %v646 = vmax.f32 %v610, 0.0
      %v647 = vmax.f32 %v615, 0.0
      %v648 = vmax.f32 %v618, 0.0
      %v649 = vmax.f32 %v623, 0.0
      %v650 = vmax.f32 %v626, 0.0
      %v651 = vmax.f32 %v631, 0.0
      %v652 = vmax.f32 %v634, 0.0
      %v653 = vld [vmem:[%s5] sm:$0xf]
      %v654 = vld [vmem:[%s5 + $0x4] sm:$0xf]
      %v655 = vld [vmem:[%s5 + $0x8] sm:$0xf]
      %v656 = vld [vmem:[%s5 + $0xc] sm:$0xf]
      %v657 = vld [vmem:[%s5 + $0x10] sm:$0xf]
      %v658 = vld [vmem:[%s5 + $0x14] sm:$0xf]
      %v659 = vld [vmem:[%s5 + $0x18] sm:$0xf]
      %v660 = vld [vmem:[%s5 + $0x1c] sm:$0xf]
      %v661 = vld [vmem:[%s6] sm:$0x1]
      %v662 = vpack.c.bf16 %v638, %v637
      %v663 = vpack.c.bf16 %v640, %v639
      %v664 = vpack.c.bf16 %v642, %v641
      %v665 = vpack.c.bf16 %v644, %v643
      %v666 = vpack.c.bf16 %v646, %v645
      %v667 = vpack.c.bf16 %v648, %v647
      %v668 = vpack.c.bf16 %v650, %v649
      %v669 = vpack.c.bf16 %v652, %v651
      %v671 = vlaneseq
      %v672 = vshrl.u32 %v671, 7
      %v673 = vsub.s32 0, %v672
      %v674 = vrot.slane %v661, %v673
      %v684 = vunpack.c.l.b16 %v653
      %v685 = vunpack.c.l.b16 %v654
      %v686 = vunpack.c.l.b16 %v655
      %v687 = vunpack.c.l.b16 %v656
      %v688 = vunpack.c.l.b16 %v657
      %v689 = vunpack.c.l.b16 %v658
      %v690 = vunpack.c.l.b16 %v659
      %v691 = vunpack.c.l.b16 %v660
      %v692 = vpack.c.b16 %v685, %v684
      %v693 = vpack.c.b16 %v687, %v686
      %v694 = vpack.c.b16 %v689, %v688
      %v695 = vpack.c.b16 %v691, %v690
      %v701 = vsel %vm515, %v662, 0
      %v704 = vsel %vm515, %v663, 0
      %v707 = vsel %vm515, %v664, 0
      %v710 = vsel %vm515, %v665, 0
      %v713 = vsel %vm515, %v666, 0
      %v716 = vsel %vm515, %v667, 0
      %v719 = vsel %vm515, %v668, 0
      %v722 = vsel %vm515, %v669, 0
      %724 = vmatprep.subr.bf16.mxu0 0
      %725 = vmatpush1.bf16.msra.mxu0 %v692
      %726 = vmatprep.subr.bf16.mxu0 0
      %727 = vmatpush1.bf16.msra.mxu0 %v693
      %728 = vmatprep.subr.bf16.mxu0 0
      %729 = vmatpush1.bf16.msra.mxu0 %v694
      %730 = vmatprep.subr.bf16.mxu0 0
      %731 = vmatpush1.bf16.msra.mxu0 %v695
      %732 = vmatprep.subr.bf16.mxu0 0
      %733 = vmatpush1.bf16.msra.mxu0 0
      %734 = vmatprep.subr.bf16.mxu0 0
      %735 = vmatpush1.bf16.msra.mxu0 0
      %736 = vmatprep.subr.bf16.mxu0 0
      %737 = vmatpush1.bf16.msra.mxu0 0
      %738 = vmatprep.subr.bf16.mxu0 0
      %739 = vmatpush1.bf16.msra.mxu0 0
      %740 = vmatprep.subr.bf16.mxu0 0
      %741 = vmatpush1.bf16.msra.mxu0 0
      %742 = vmatprep.subr.bf16.mxu0 0
      %743 = vmatpush1.bf16.msra.mxu0 0
      %744 = vmatprep.subr.bf16.mxu0 0
      %745 = vmatpush1.bf16.msra.mxu0 0
      %746 = vmatprep.subr.bf16.mxu0 0
      %747 = vmatpush1.bf16.msra.mxu0 0
      %748 = vmatprep.subr.bf16.mxu0 0
      %749 = vmatpush1.bf16.msra.mxu0 0
      %750 = vmatprep.subr.bf16.mxu0 0
      %751 = vmatpush1.bf16.msra.mxu0 0
      %752 = vmatprep.subr.bf16.mxu0 0
      %753 = vmatpush1.bf16.msra.mxu0 0
      %754 = vmatprep.subr.bf16.mxu0 0
      %755 = vmatpush1.bf16.msra.mxu0 0
      %756 = vmatprep.mubr.bf16.mxu0 0
      %757 = vmatmul.mubr.bf16.gmra.mrb[0].mxu0 %v701
      %v758 = vpop.f32.mrb[0].mxu0
      %v759 = vadd.f32 %v674, %v758
      %v760 = vpop.f32.mrb[0].mxu0
      %v761 = vpop.f32.mrb[0].mxu0
      %v762 = vadd.f32 %v674, %v761
      %v763 = vpop.f32.mrb[0].mxu0
      %764 = vmatprep.mubr.bf16.mxu0 0
      %765 = vmatmul.mubr.bf16.gmra.mrb[0].mxu0 %v704
      %v766 = vpop.f32.mrb[0].mxu0
      %v767 = vadd.f32 %v674, %v766
      %v768 = vpop.f32.mrb[0].mxu0
      %v769 = vpop.f32.mrb[0].mxu0
      %v770 = vadd.f32 %v674, %v769
      %v771 = vpop.f32.mrb[0].mxu0
      %772 = vmatprep.mubr.bf16.mxu0 0
      %773 = vmatmul.mubr.bf16.gmra.mrb[0].mxu0 %v707
      %v774 = vpop.f32.mrb[0].mxu0
      %v775 = vadd.f32 %v674, %v774
      %v776 = vpop.f32.mrb[0].mxu0
      %v777 = vpop.f32.mrb[0].mxu0
      %v778 = vadd.f32 %v674, %v777
      %v779 = vpop.f32.mrb[0].mxu0
      %780 = vmatprep.mubr.bf16.mxu0 0
      %781 = vmatmul.mubr.bf16.gmra.mrb[0].mxu0 %v710
      %v782 = vpop.f32.mrb[0].mxu0
      %v783 = vadd.f32 %v674, %v782
      %v784 = vpop.f32.mrb[0].mxu0
      %v785 = vpop.f32.mrb[0].mxu0
      %v786 = vadd.f32 %v674, %v785
      %v787 = vpop.f32.mrb[0].mxu0
      %788 = vmatprep.mubr.bf16.mxu0 0
      %789 = vmatmul.mubr.bf16.gmra.mrb[0].mxu0 %v713
      %v790 = vpop.f32.mrb[0].mxu0
      %v791 = vadd.f32 %v674, %v790
      %v792 = vpop.f32.mrb[0].mxu0
      %v793 = vpop.f32.mrb[0].mxu0
      %v794 = vadd.f32 %v674, %v793
      %v795 = vpop.f32.mrb[0].mxu0
      %796 = vmatprep.mubr.bf16.mxu0 0
      %797 = vmatmul.mubr.bf16.gmra.mrb[0].mxu0 %v716
      %v798 = vpop.f32.mrb[0].mxu0
      %v799 = vadd.f32 %v674, %v798
      %v800 = vpop.f32.mrb[0].mxu0
      %v801 = vpop.f32.mrb[0].mxu0
      %v802 = vadd.f32 %v674, %v801
      %v803 = vpop.f32.mrb[0].mxu0
      %804 = vmatprep.mubr.bf16.mxu0 0
      %805 = vmatmul.mubr.bf16.gmra.mrb[0].mxu0 %v719
      %v806 = vpop.f32.mrb[0].mxu0
      %v807 = vadd.f32 %v674, %v806
      %v808 = vpop.f32.mrb[0].mxu0
      %v809 = vpop.f32.mrb[0].mxu0
      %v810 = vadd.f32 %v674, %v809
      %v811 = vpop.f32.mrb[0].mxu0
      %812 = vmatprep.mubr.bf16.mxu0 0
      %813 = vmatmul.mubr.bf16.gmra.mrb[0].mxu0 %v722
      %v814 = vpop.f32.mrb[0].mxu0
      %v815 = vadd.f32 %v674, %v814
      %v816 = vpop.f32.mrb[0].mxu0
      %v817 = vpop.f32.mrb[0].mxu0
      %v818 = vadd.f32 %v674, %v817
      %v819 = vpop.f32.mrb[0].mxu0
      %820 = vdwg.mxu0
      %vm821 = vcmask 130048
      %822 = vst.msk [vmem:[%s280] sm:$0xff] %vm821, %v759
      %823 = vst.msk [vmem:[%s280 + $0x8] sm:$0xff] %vm821, %v762
      %824 = vst.msk [vmem:[%s280 + $0x10] sm:$0xff] %vm821, %v767
      %825 = vst.msk [vmem:[%s280 + $0x18] sm:$0xff] %vm821, %v770
      %826 = vst.msk [vmem:[%s280 + $0x20] sm:$0xff] %vm821, %v775
      %827 = vst.msk [vmem:[%s280 + $0x28] sm:$0xff] %vm821, %v778
      %828 = vst.msk [vmem:[%s280 + $0x30] sm:$0xff] %vm821, %v783
      %829 = vst.msk [vmem:[%s280 + $0x38] sm:$0xff] %vm821, %v786
      %830 = vst.msk [vmem:[%s280 + $0x40] sm:$0xff] %vm821, %v791
      %831 = vst.msk [vmem:[%s280 + $0x48] sm:$0xff] %vm821, %v794
      %832 = vst.msk [vmem:[%s280 + $0x50] sm:$0xff] %vm821, %v799
      %833 = vst.msk [vmem:[%s280 + $0x58] sm:$0xff] %vm821, %v802
      %834 = vst.msk [vmem:[%s280 + $0x60] sm:$0xff] %vm821, %v807
      %835 = vst.msk [vmem:[%s280 + $0x68] sm:$0xff] %vm821, %v810
      %836 = vst.msk [vmem:[%s280 + $0x70] sm:$0xff] %vm821, %v815
      %837 = vst.msk [vmem:[%s280 + $0x78] sm:$0xff] %vm821, %v818
      %s838 = smul.u32 16, %s18
      %p839 = scmp.lt.s32.totalorder %s838, 31
      %s840 = scalar_select %p839, %s838, 31
      %s841 = smul.addr %s840, 8
      %s842 = scalar_lea.vmem %s7, %s841
      // Predicated region
      $region49: #{_forward_impl.1} parent=47 // pred_check
        %p843 = pneg %p188
      $region50: #{_forward_impl.1} parent=47 // pred_check_branch
        %845 = sbr.rel (%p843) target = $region52
      $region51: #{_forward_impl.1} parent=47 // pred_region
        %s846 = smul.u32 16, %s18
      $region52: #{_forward_impl.1} parent=47 // pred_fallthru
        _
    $region48: #{_forward_impl.1} parent=5 // pred_fallthru
      _
    %p847 = scmp.le.s32.totalorder 2, %s13
    // Predicated region
    $region53: #{_forward_impl.1} parent=5 // pred_check
      %p848 = pneg %p847
    $region54: #{_forward_impl.1} parent=5 // pred_check_branch
      %850 = sbr.rel (%p848) target = $region56
    $region55: #{_forward_impl.1} parent=5 // pred_region
      %s851 = ssub.s32 %s13, 2
      // Predicated region
      $region57: #{_forward_impl.1} parent=55 // pred_check
        %p852 = pneg %p194
      $region58: #{_forward_impl.1} parent=55 // pred_check_branch
        %854 = sbr.rel (%p852) target = $region60
      $region59: #{_forward_impl.1} parent=55 // pred_region
        %s855 = smul.u32 16, %s19
        %p856 = scmp.lt.s32.totalorder %s855, 31
        %s857 = scalar_select %p856, %s855, 31
        %s858 = smul.addr %s857, 8
        %s859 = scalar_lea.vmem %s7, %s858
      $region60: #{_forward_impl.1} parent=55 // pred_fallthru
        _
    $region56: #{_forward_impl.1} parent=5 // pred_fallthru
      _
  $region6: #{_forward_impl.1} parent=0 // loop_footer
    %s17 = sadd.s32 1, %s13
  $region7: #{_forward_impl.1} parent=0 // loop_footer_branch
    %12 = sbr.rel target = $region3
  $region8: #{_forward_impl.1} parent=0 // loop_exit
    _

</llo_original>
